<compile_context>
chip_gen: v5e
topology: v5e:2x2
jax: 0.10.0
libtpu: 0.0.40
codegen_flags: <defaults>
</compile_context>

<pallas_src>
import math

import jax
import jax.numpy as jnp
import numpy as np
from jax.experimental import pallas as pl
from jax.experimental.pallas import tpu as pltpu

# ---------------------------------------------------------------- configuration
CFG = dict(
    channels=64,
    num_steps=50,
    diffusion_embedding_dim=128,
    side_dim=16,
    layers=2,
    time_layer=dict(type="none"),      # -> self.time_layer = None
    spatial_layer=dict(type="none"),   # -> self.feature_layer = None
)
INPUTDIM = 2
TN_MAX = 1024   # lane tile along N = K*L; sweep 512-2048 per chip (v5e prefers 512-1024)


# ---------------------------------------------------------------- Pallas kernels
def diff_emb_kernel(emb_ref, w1t_ref, b1_ref, w2t_ref, b2_ref,
                    wdt_ref, bd_ref, wmt_ref, bmc_ref, out_ref):
    """DiffusionEmbedding MLP + per-layer diffusion_projection, pre-folded through
    the mid projection:

      out[l, b, :] = (silu(silu(emb W1^T + b1) W2^T + b2) Wd[l]^T + bd[l]) Wmid[l]^T
                     + (b_mid[l] + b_cond[l])

    i.e. the effective per-(layer, batch) bias of the fused mid+cond projection.
    """
    h = jnp.dot(emb_ref[...], w1t_ref[...], preferred_element_type=jnp.float32) + b1_ref[...]
    h = h * jax.nn.sigmoid(h)   # SiLU
    h = jnp.dot(h, w2t_ref[...], preferred_element_type=jnp.float32) + b2_ref[...]
    h = h * jax.nn.sigmoid(h)   # SiLU
    for l in range(out_ref.shape[0]):
        d = jnp.dot(h, wdt_ref[l], preferred_element_type=jnp.float32) + bd_ref[l]        # (B, C)
        out_ref[l] = jnp.dot(d, wmt_ref[l], preferred_element_type=jnp.float32) + bmc_ref[l]  # (B, 2C)


def make_diff_csdi_kernel(return_hidden):
    """Full diff_CSDI hot path for one (batch, N-tile) grid point."""

    def kernel(x_ref, cond_ref, bias_ref,
               w_in_ref, b_in_ref, w_cond_all_ref,
               w_mid_ref, w_out_ref, b_out_ref,
               w_o1_ref, b_o1_ref, w_o2_ref, b_o2_ref,
               out_ref, *hid_ref):
        nL, C2, C = w_mid_ref.shape          # (layers, 2C, C)
        idim = w_in_ref.shape[1]
        cdt = w_mid_ref.dtype                # matmul operand dtype (bf16 or f32)
        inv_sqrt2 = 1.0 / math.sqrt(2.0)

        # ---- input_projection (kernel_size=1, K=idim=2): VPU FMAs, not an MXU matmul ----
        x2 = x_ref[0]                                                   # (idim, TN) f32
        h = b_in_ref[...] + w_in_ref[:, 0:1] * x2[0:1, :]               # (C, TN)
        for c in range(1, idim):
            h = h + w_in_ref[:, c:c + 1] * x2[c:c + 1, :]
        h = jnp.maximum(h, 0.0)                                         # ReLU

        # ---- all layers' cond projections hoisted into one MXU matmul (M = nL*2C) ----
        cond = cond_ref[0].astype(cdt)                                  # (SD, TN)
        cond_all = jnp.dot(w_cond_all_ref[...], cond,
                           preferred_element_type=jnp.float32)          # (nL*2C, TN) f32

        # effective per-(layer) bias for this batch:  w_mid @ dproj + b_mid + b_cond
        bias_b = bias_ref[0]                                            # (nL*2C, 1) f32

        skip = None
        for l in range(nL):                                             # residual layers (static unroll)
            # TODO(synk): time/spatial sub-layers (transformer / longformer / bilstm /
            # diffconv) are configured to 'none' => None in ResidualBlock, hence identity.
            y = jnp.dot(w_mid_ref[l], h.astype(cdt),
                        preferred_element_type=jnp.float32)             # (2C, TN)
            y = y + cond_all[l * C2:(l + 1) * C2, :] + bias_b[l * C2:(l + 1) * C2, :]
            gate, filt = y[:C], y[C:]                                   # torch.chunk(y, 2, dim=1)
            # gate nonlinearity kept in f32 (v5e has no bf16 VPU/EUP); bf16 here is a
            # v6e/v7x-only micro-opt.
            g = jax.nn.sigmoid(gate) * jnp.tanh(filt)                   # (C, TN)
            y = jnp.dot(w_out_ref[l], g.astype(cdt),
                        preferred_element_type=jnp.float32) + b_out_ref[l]   # (2C, TN)
            res, sk = y[:C], y[C:]
            h = (h + res) * inv_sqrt2
            skip = sk if skip is None else skip + sk

        # ---- output_projection1 (1/sqrt(nL) pre-folded into weights) + ReLU ----
        xs = jnp.dot(w_o1_ref[...], skip.astype(cdt),
                     preferred_element_type=jnp.float32) + b_o1_ref[...]
        xs = jnp.maximum(xs, 0.0)

        # ---- output_projection2 (1, C): VPU multiply + sublane reduce (keeps MXU free) ----
        out_ref[0] = jnp.sum(w_o2_ref[...] * xs, axis=0, keepdims=True) + b_o2_ref[...]
        if return_hidden:
            hid_ref[0][0] = xs

    return kernel


# ---------------------------------------------------------------- parameters
def init_params(key, cfg, inputdim=2):
    C = cfg["channels"]; E = cfg["diffusion_embedding_dim"]
    SD = cfg["side_dim"]; nL = cfg["layers"]; num_steps = cfg["num_steps"]

    keys = iter(jax.random.split(key, 32))
    nrm = lambda shape, std: jax.random.normal(next(keys), shape, jnp.float32) * std
    kaiming = lambda shape, fan_in: nrm(shape, math.sqrt(2.0 / fan_in))   # kaiming_normal_, k=1

    # DiffusionEmbedding._build_embedding
    half = E // 2
    steps = jnp.arange(num_steps, dtype=jnp.float32)[:, None]
    freqs = (10.0 ** (jnp.arange(half, dtype=jnp.float32) / (half - 1) * 4.0))[None, :]
    tab = steps * freqs
    table = jnp.concatenate([jnp.sin(tab), jnp.cos(tab)], axis=1)         # (num_steps, E)

    p = dict(table=table)
    p["w1"] = nrm((E, E), 0.05); p["b1"] = nrm((E,), 0.02)                # projection1
    p["w2"] = nrm((E, E), 0.05); p["b2"] = nrm((E,), 0.02)                # projection2
    p["wd"] = nrm((nL, C, E), 0.05); p["bd"] = nrm((nL, C), 0.02)         # diffusion_projection
    p["w_cond"] = kaiming((nL, 2 * C, SD), SD); p["b_cond"] = nrm((nL, 2 * C), 0.02)
    p["w_mid"] = kaiming((nL, 2 * C, C), C);    p["b_mid"]  = nrm((nL, 2 * C), 0.02)
    p["w_out"] = kaiming((nL, 2 * C, C), C);    p["b_out"]  = nrm((nL, 2 * C), 0.02)
    p["w_in"] = kaiming((C, inputdim), inputdim); p["b_in"] = nrm((C,), 0.02)
    p["w_o1"] = kaiming((C, C), C); p["b_o1"] = nrm((C,), 0.02)
    p["w_o2"] = jnp.zeros((1, C), jnp.float32)  # nn.init.zeros_(output_projection2.weight)
    p["b_o2"] = nrm((1,), 0.02)
    return p


# ---------------------------------------------------------------- wrapper
def diff_csdi_forward(params, x, cond_info, diffusion_step, cfg, inputdim=2,
                      return_hidden=False, matmul_dtype=jnp.bfloat16, tn_max=TN_MAX):
    C = cfg["channels"]; SD = cfg["side_dim"]; nL = cfg["layers"]
    B, idm, K, Lh = x.shape
    N = K * Lh
    assert idm == inputdim

    # -- DiffusionEmbedding MLP + diffusion_projection folded through w_mid (tiny Pallas) --
    emb = jnp.take(params["table"], diffusion_step, axis=0)              # (B, E)
    bmc = (params["b_mid"] + params["b_cond"])[:, None, :]               # (nL, 1, 2C)
    bias_all = pl.pallas_call(
        diff_emb_kernel,
        out_shape=jax.ShapeDtypeStruct((nL, B, 2 * C), jnp.float32),
    )(emb,
      params["w1"].T, params["b1"][None, :],
      params["w2"].T, params["b2"][None, :],
      jnp.transpose(params["wd"], (0, 2, 1)), params["bd"][:, None, :],
      jnp.transpose(params["w_mid"], (0, 2, 1)), bmc)
    # (nL, B, 2C) -> (B, nL*2C, 1): per-layer (2C,1) static slices in the main kernel
    bias_eff = jnp.transpose(bias_all, (1, 0, 2)).reshape(B, nL * 2 * C, 1)

    # -- tile-size selection & zero-padding along N = K*L (pointwise convs -> safe) --
    TN = min(tn_max, ((N + 127) // 128) * 128)
    N_pad = ((N + TN - 1) // TN) * TN
    xf = x.reshape(B, inputdim, N)
    cf = cond_info.reshape(B, SD, N)
    if N_pad != N:
        pad = ((0, 0), (0, 0), (0, N_pad - N))
        xf = jnp.pad(xf, pad)
        cf = jnp.pad(cf, pad)

    # -- weight prep (tiny host-side folds / casts) --
    w_in, b_in = params["w_in"], params["b_in"][:, None]
    w_cond_all = params["w_cond"].reshape(nL * 2 * C, SD).astype(matmul_dtype)
    w_mid = params["w_mid"].astype(matmul_dtype)
    w_out = params["w_out"].astype(matmul_dtype)
    b_out = params["b_out"][:, :, None]
    w_o1 = (params["w_o1"] / math.sqrt(nL)).astype(matmul_dtype)   # fold 1/sqrt(#layers)
    b_o1 = params["b_o1"][:, None]
    w_o2 = params["w_o2"].T                                        # (C, 1)
    b_o2 = params["b_o2"][:, None]                                 # (1, 1)

    def rep(a):  # replicated (grid-invariant) full-array spec
        return pl.BlockSpec(a.shape, lambda b, n, _nd=a.ndim: (0,) * _nd)

    grid = (B, N_pad // TN)
    out_spec = pl.BlockSpec((1, 1, TN), lambda b, n: (b, 0, n))
    out_shape = jax.ShapeDtypeStruct((B, 1, N_pad), jnp.float32)
    if return_hidden:
        out_specs = (out_spec, pl.BlockSpec((1, C, TN), lambda b, n: (b, 0, n)))
        out_shapes = (out_shape, jax.ShapeDtypeStruct((B, C, N_pad), jnp.float32))
    else:
        out_specs, out_shapes = out_spec, out_shape

    res = pl.pallas_call(
        make_diff_csdi_kernel(return_hidden),
        grid=grid,
        in_specs=[
            pl.BlockSpec((1, inputdim, TN), lambda b, n: (b, 0, n)),
            pl.BlockSpec((1, SD, TN), lambda b, n: (b, 0, n)),
            pl.BlockSpec((1, nL * 2 * C, 1), lambda b, n: (b, 0, 0)),
            rep(w_in), rep(b_in), rep(w_cond_all),
            rep(w_mid), rep(w_out), rep(b_out),
            rep(w_o1), rep(b_o1), rep(w_o2), rep(b_o2),
        ],
        out_specs=out_specs,
        out_shape=out_shapes,
        compiler_params=pltpu.CompilerParams(
            dimension_semantics=("parallel", "parallel"),
            vmem_limit_bytes=48 * 1024 * 1024),
    )(xf, cf, bias_eff, w_in, b_in, w_cond_all, w_mid, w_out, b_out,
      w_o1, b_o1, w_o2, b_o2)

    if return_hidden:
        out_arr, hid_arr = res
        return out_arr[:, 0, :N].reshape(B, K, Lh), hid_arr[:, :, :N]
    return res[:, 0, :N].reshape(B, K, Lh)


# ---------------------------------------------------------------- pure-JAX reference
def reference_forward(params, x, cond_info, diffusion_step, cfg, inputdim=2):
    C = cfg["channels"]; SD = cfg["side_dim"]; nL = cfg["layers"]
    B, idm, K, Lh = x.shape
    N = K * Lh
    hp = jax.lax.Precision.HIGHEST
    conv = lambda w, b, v: jnp.einsum("oc,bcn->bon", w, v, precision=hp) + b[None, :, None]

    xf = x.reshape(B, idm, N)
    h = jax.nn.relu(conv(params["w_in"], params["b_in"], xf))
    emb = params["table"][diffusion_step]
    e = jax.nn.silu(jnp.dot(emb, params["w1"].T, precision=hp) + params["b1"])
    e = jax.nn.silu(jnp.dot(e, params["w2"].T, precision=hp) + params["b2"])
    cf = cond_info.reshape(B, SD, N)

    skip_sum = jnp.zeros_like(h)
    for l in range(nL):
        d = jnp.dot(e, params["wd"][l].T, precision=hp) + params["bd"][l]
        y = h + d[:, :, None]
        y = conv(params["w_mid"][l], params["b_mid"][l], y)
        y = y + conv(params["w_cond"][l], params["b_cond"][l], cf)
        gate, filt = y[:, :C], y[:, C:]
        y = jax.nn.sigmoid(gate) * jnp.tanh(filt)
        y = conv(params["w_out"][l], params["b_out"][l], y)
        res, sk = y[:, :C], y[:, C:]
        h = (h + res) / math.sqrt(2.0)
        skip_sum = skip_sum + sk
    xs = skip_sum / math.sqrt(nL)
    xs = jax.nn.relu(conv(params["w_o1"], params["b_o1"], xs))
    out = conv(params["w_o2"], params["b_o2"], xs)
    return out.reshape(B, K, Lh), xs


# ---------------------------------------------------------------- main
if __name__ == "__main__":
    key = jax.random.PRNGKey(0)
    kp, kx, kc = jax.random.split(key, 3)

    B, K, Lh = 2, 32, 16                                  # N = K*L = 512 -> one TN=512 tile
    params = init_params(kp, CFG, INPUTDIM)
    x = jax.random.normal(kx, (B, INPUTDIM, K, Lh), jnp.float32)
    cond_info = jax.random.normal(kc, (B, CFG["side_dim"], K, Lh), jnp.float32)
    diffusion_step = jnp.array([3, 17], dtype=jnp.int32)

    # production path: bf16 MXU operands, no debug hidden output
    out = diff_csdi_forward(params, x, cond_info, diffusion_step, CFG, INPUTDIM)
    out = jax.block_until_ready(out)
    assert out.shape == (B, K, Lh)

    ref_out, ref_hid = reference_forward(params, x, cond_info, diffusion_step, CFG, INPUTDIM)
    np.testing.assert_allclose(np.asarray(out), np.asarray(ref_out), rtol=1e-2, atol=1e-2)

    # f32 MXU operands + debug hidden output: tight structural check
    out32, hid32 = diff_csdi_forward(params, x, cond_info, diffusion_step, CFG, INPUTDIM,
                                     return_hidden=True, matmul_dtype=jnp.float32)
    jax.block_until_ready((out32, hid32))
    np.testing.assert_allclose(np.asarray(out32), np.asarray(ref_out), rtol=1e-2, atol=1e-2)
    np.testing.assert_allclose(np.asarray(hid32), np.asarray(ref_hid), rtol=1e-2, atol=1e-2)

    # bf16 path + ragged N (exercises padding/masking) at bf16-appropriate tolerance
    K2, L2 = 7, 13                                        # N = 91, not a multiple of 128
    x2 = jax.random.normal(kx, (B, INPUTDIM, K2, L2), jnp.float32)
    c2 = jax.random.normal(kc, (B, CFG["side_dim"], K2, L2), jnp.float32)
    out_b, hid_b = diff_csdi_forward(params, x2, c2, diffusion_step, CFG, INPUTDIM,
                                     return_hidden=True)
    jax.block_until_ready((out_b, hid_b))
    ref_out2, ref_hid2 = reference_forward(params, x2, c2, diffusion_step, CFG, INPUTDIM)
    np.testing.assert_allclose(np.asarray(out_b), np.asarray(ref_out2), rtol=5e-2, atol=5e-2)
    np.testing.assert_allclose(np.asarray(hid_b), np.asarray(ref_hid2), rtol=5e-2, atol=5e-2)

    print("KERNEL_OK")
</pallas_src>

<mosaic_0001>
module attributes {stable_mosaic.version = 11 : i64} {
  func.func @diff_emb_kernel(%arg0: memref<2x128xf32, #tpu.memory_space<vmem>>, %arg1: memref<128x128xf32, #tpu.memory_space<vmem>>, %arg2: memref<1x128xf32, #tpu.memory_space<vmem>>, %arg3: memref<128x128xf32, #tpu.memory_space<vmem>>, %arg4: memref<1x128xf32, #tpu.memory_space<vmem>>, %arg5: memref<2x128x64xf32, #tpu.memory_space<vmem>>, %arg6: memref<2x1x64xf32, #tpu.memory_space<vmem>>, %arg7: memref<2x64x128xf32, #tpu.memory_space<vmem>>, %arg8: memref<2x1x128xf32, #tpu.memory_space<vmem>>, %arg9: memref<2x2x128xf32, #tpu.memory_space<vmem>>) attributes {dimension_semantics = [], scalar_prefetch = 0 : i64, scratch_operands = 0 : i64, tpu.core_type = #tpu.core_type<tc>} {
    %c0 = arith.constant 0 : index
    %c0_0 = arith.constant 0 : index
    %0 = vector.load %arg0[%c0, %c0_0] : memref<2x128xf32, #tpu.memory_space<vmem>>, vector<2x128xf32>
    %c0_1 = arith.constant 0 : index
    %c0_2 = arith.constant 0 : index
    %1 = vector.load %arg1[%c0_1, %c0_2] : memref<128x128xf32, #tpu.memory_space<vmem>>, vector<128x128xf32>
    %cst = arith.constant dense<0.000000e+00> : vector<2x128xf32>
    %2 = tpu.matmul %0, %1, %cst {dimension_numbers = #tpu.dot_dimension_numbers<[1], [0], [0], [1], [0, 0, 1, 1], [], []>} : vector<2x128xf32>, vector<128x128xf32>, vector<2x128xf32> -> vector<2x128xf32>
    %c0_3 = arith.constant 0 : index
    %c0_4 = arith.constant 0 : index
    %3 = vector.load %arg2[%c0_3, %c0_4] : memref<1x128xf32, #tpu.memory_space<vmem>>, vector<1x128xf32>
    %4 = vector.broadcast %3 : vector<1x128xf32> to vector<2x128xf32>
    %5 = arith.addf %2, %4 : vector<2x128xf32>
    %6 = arith.negf %5 : vector<2x128xf32>
    %7 = math.exp %6 : vector<2x128xf32>
    %cst_5 = arith.constant 1.000000e+00 : f32
    %8 = vector.broadcast %cst_5 : f32 to vector<2x128xf32>
    %9 = arith.addf %8, %7 : vector<2x128xf32>
    %10 = arith.divf %8, %9 : vector<2x128xf32>
    %11 = arith.mulf %5, %10 : vector<2x128xf32>
    %c0_6 = arith.constant 0 : index
    %c0_7 = arith.constant 0 : index
    %12 = vector.load %arg3[%c0_6, %c0_7] : memref<128x128xf32, #tpu.memory_space<vmem>>, vector<128x128xf32>
    %cst_8 = arith.constant dense<0.000000e+00> : vector<2x128xf32>
    %13 = tpu.matmul %11, %12, %cst_8 {dimension_numbers = #tpu.dot_dimension_numbers<[1], [0], [0], [1], [0, 0, 1, 1], [], []>} : vector<2x128xf32>, vector<128x128xf32>, vector<2x128xf32> -> vector<2x128xf32>
    %c0_9 = arith.constant 0 : index
    %c0_10 = arith.constant 0 : index
    %14 = vector.load %arg4[%c0_9, %c0_10] : memref<1x128xf32, #tpu.memory_space<vmem>>, vector<1x128xf32>
    %15 = vector.broadcast %14 : vector<1x128xf32> to vector<2x128xf32>
    %16 = arith.addf %13, %15 : vector<2x128xf32>
    %17 = arith.negf %16 : vector<2x128xf32>
    %18 = math.exp %17 : vector<2x128xf32>
    %cst_11 = arith.constant 1.000000e+00 : f32
    %19 = vector.broadcast %cst_11 : f32 to vector<2x128xf32>
    %20 = arith.addf %19, %18 : vector<2x128xf32>
    %21 = arith.divf %19, %20 : vector<2x128xf32>
    %22 = arith.mulf %16, %21 : vector<2x128xf32>
    %c0_12 = arith.constant 0 : index
    %c0_13 = arith.constant 0 : index
    %c0_14 = arith.constant 0 : index
    %23 = vector.load %arg5[%c0_12, %c0_13, %c0_14] : memref<2x128x64xf32, #tpu.memory_space<vmem>>, vector<1x128x64xf32>
    %24 = vector.shape_cast %23 : vector<1x128x64xf32> to vector<128x64xf32>
    %cst_15 = arith.constant dense<0.000000e+00> : vector<2x64xf32>
    %25 = tpu.matmul %22, %24, %cst_15 {dimension_numbers = #tpu.dot_dimension_numbers<[1], [0], [0], [1], [0, 0, 1, 1], [], []>} : vector<2x128xf32>, vector<128x64xf32>, vector<2x64xf32> -> vector<2x64xf32>
    %c0_16 = arith.constant 0 : index
    %c0_17 = arith.constant 0 : index
    %c0_18 = arith.constant 0 : index
    %26 = vector.load %arg6[%c0_16, %c0_17, %c0_18] : memref<2x1x64xf32, #tpu.memory_space<vmem>>, vector<1x1x64xf32>
    %27 = vector.shape_cast %26 : vector<1x1x64xf32> to vector<1x64xf32>
    %28 = vector.broadcast %27 : vector<1x64xf32> to vector<2x64xf32>
    %29 = arith.addf %25, %28 : vector<2x64xf32>
    %c0_19 = arith.constant 0 : index
    %c0_20 = arith.constant 0 : index
    %c0_21 = arith.constant 0 : index
    %30 = vector.load %arg7[%c0_19, %c0_20, %c0_21] : memref<2x64x128xf32, #tpu.memory_space<vmem>>, vector<1x64x128xf32>
    %31 = vector.shape_cast %30 : vector<1x64x128xf32> to vector<64x128xf32>
    %cst_22 = arith.constant dense<0.000000e+00> : vector<2x128xf32>
    %32 = tpu.matmul %29, %31, %cst_22 {dimension_numbers = #tpu.dot_dimension_numbers<[1], [0], [0], [1], [0, 0, 1, 1], [], []>} : vector<2x64xf32>, vector<64x128xf32>, vector<2x128xf32> -> vector<2x128xf32>
    %c0_23 = arith.constant 0 : index
    %c0_24 = arith.constant 0 : index
    %c0_25 = arith.constant 0 : index
    %33 = vector.load %arg8[%c0_23, %c0_24, %c0_25] : memref<2x1x128xf32, #tpu.memory_space<vmem>>, vector<1x1x128xf32>
    %34 = vector.shape_cast %33 : vector<1x1x128xf32> to vector<1x128xf32>
    %35 = vector.broadcast %34 : vector<1x128xf32> to vector<2x128xf32>
    %36 = arith.addf %32, %35 : vector<2x128xf32>
    %c0_26 = arith.constant 0 : index
    %c0_27 = arith.constant 0 : index
    %c0_28 = arith.constant 0 : index
    %37 = vector.load %arg9[%c0_26, %c0_27, %c0_28] : memref<2x2x128xf32, #tpu.memory_space<vmem>>, vector<1x2x128xf32>
    %38 = vector.shape_cast %37 : vector<1x2x128xf32> to vector<2x128xf32>
    %39 = vector.shape_cast %36 : vector<2x128xf32> to vector<1x2x128xf32>
    tpu.vector_store %arg9[%c0_26, %c0_27, %c0_28], %39 {strides = array<i32>} : memref<2x2x128xf32, #tpu.memory_space<vmem>>, vector<1x2x128xf32>,
    %c1 = arith.constant 1 : index
    %c0_29 = arith.constant 0 : index
    %c0_30 = arith.constant 0 : index
    %40 = vector.load %arg5[%c1, %c0_29, %c0_30] : memref<2x128x64xf32, #tpu.memory_space<vmem>>, vector<1x128x64xf32>
    %41 = vector.shape_cast %40 : vector<1x128x64xf32> to vector<128x64xf32>
    %cst_31 = arith.constant dense<0.000000e+00> : vector<2x64xf32>
    %42 = tpu.matmul %22, %41, %cst_31 {dimension_numbers = #tpu.dot_dimension_numbers<[1], [0], [0], [1], [0, 0, 1, 1], [], []>} : vector<2x128xf32>, vector<128x64xf32>, vector<2x64xf32> -> vector<2x64xf32>
    %c1_32 = arith.constant 1 : index
    %c0_33 = arith.constant 0 : index
    %c0_34 = arith.constant 0 : index
    %43 = vector.load %arg6[%c1_32, %c0_33, %c0_34] : memref<2x1x64xf32, #tpu.memory_space<vmem>>, vector<1x1x64xf32>
    %44 = vector.shape_cast %43 : vector<1x1x64xf32> to vector<1x64xf32>
    %45 = vector.broadcast %44 : vector<1x64xf32> to vector<2x64xf32>
    %46 = arith.addf %42, %45 : vector<2x64xf32>
    %c1_35 = arith.constant 1 : index
    %c0_36 = arith.constant 0 : index
    %c0_37 = arith.constant 0 : index
    %47 = vector.load %arg7[%c1_35, %c0_36, %c0_37] : memref<2x64x128xf32, #tpu.memory_space<vmem>>, vector<1x64x128xf32>
    %48 = vector.shape_cast %47 : vector<1x64x128xf32> to vector<64x128xf32>
    %cst_38 = arith.constant dense<0.000000e+00> : vector<2x128xf32>
    %49 = tpu.matmul %46, %48, %cst_38 {dimension_numbers = #tpu.dot_dimension_numbers<[1], [0], [0], [1], [0, 0, 1, 1], [], []>} : vector<2x64xf32>, vector<64x128xf32>, vector<2x128xf32> -> vector<2x128xf32>
    %c1_39 = arith.constant 1 : index
    %c0_40 = arith.constant 0 : index
    %c0_41 = arith.constant 0 : index
    %50 = vector.load %arg8[%c1_39, %c0_40, %c0_41] : memref<2x1x128xf32, #tpu.memory_space<vmem>>, vector<1x1x128xf32>
    %51 = vector.shape_cast %50 : vector<1x1x128xf32> to vector<1x128xf32>
    %52 = vector.broadcast %51 : vector<1x128xf32> to vector<2x128xf32>
    %53 = arith.addf %49, %52 : vector<2x128xf32>
    %c1_42 = arith.constant 1 : index
    %c0_43 = arith.constant 0 : index
    %c0_44 = arith.constant 0 : index
    %54 = vector.load %arg9[%c1_42, %c0_43, %c0_44] : memref<2x2x128xf32, #tpu.memory_space<vmem>>, vector<1x2x128xf32>
    %55 = vector.shape_cast %54 : vector<1x2x128xf32> to vector<2x128xf32>
    %56 = vector.shape_cast %53 : vector<2x128xf32> to vector<1x2x128xf32>
    tpu.vector_store %arg9[%c1_42, %c0_43, %c0_44], %56 {strides = array<i32>} : memref<2x2x128xf32, #tpu.memory_space<vmem>>, vector<1x2x128xf32>,
    return
  }
}

</mosaic_0001>

<llo_original>
// kernel: tpu_custom_call.1
$region0: #{tpu_custom_call.1}
  #allocation0 [shape = 'u32[]', space=smem, size = 0x4, offset = 0x4, fixed_abs, tag = 'smem constant byte address 0x4 - core index']
  #allocation1 [shape = 'u32[72,128]{1,0:T(1,128)}', space=vmem, size = 0x9000, scoped, tag = 'internal scratch']
  %s0 = inlined_call_operand.hbm [shape: f32[2,128], index: 0, kind: input, shape index: {}]
  %s1 = inlined_call_operand.vmem [shape: f32[128,128], index: 1, kind: input, shape index: {}]
  %s2 = inlined_call_operand.hbm [shape: f32[1,128], index: 2, kind: input, shape index: {}]
  %s3 = inlined_call_operand.vmem [shape: f32[128,128], index: 3, kind: input, shape index: {}]
  %s4 = inlined_call_operand.hbm [shape: f32[1,128], index: 4, kind: input, shape index: {}]
  %s5 = inlined_call_operand.vmem [shape: f32[2,128,64], index: 5, kind: input, shape index: {}]
  %s6 = inlined_call_operand.vmem [shape: f32[2,1,64], index: 6, kind: input, shape index: {}]
  %s7 = inlined_call_operand.vmem [shape: f32[2,64,128], index: 7, kind: input, shape index: {}]
  %s8 = inlined_call_operand.vmem [shape: f32[2,1,128], index: 8, kind: input, shape index: {}]
  %s9 = inlined_call_operand.hbm [shape: f32[2,2,128], index: 9, kind: output, shape index: {}]
  %s10 = sld [smem:[#allocation0]]
  $region58: #{tpu_custom_call.1} parent=0
    _
  %s12 = ssub.s32 1, %s10
  %s13 = scalar_select 0, %s12, %s10
  $region1: #{tpu_custom_call.1} parent=0
    #allocation2 [shape = 'u8[1024]{0}', space=vmem, size = 0x400, scoped, tag = 'input window, operand 0, single buffered']
    #allocation3 [shape = 's32[1]{0}', space=sflag, size = 0x4, scoped, tag = 'scoped memory for tpu_custom_call.1']
    #allocation4 [shape = 's32[1]{0}', space=sflag, size = 0x4, scoped, tag = 'scoped memory for tpu_custom_call.1']
    #allocation5 [shape = 'u8[512]{0}', space=vmem, size = 0x400, scoped, tag = 'input window, operand 2, single buffered']
    #allocation6 [shape = 's32[1]{0}', space=sflag, size = 0x4, scoped, tag = 'scoped memory for tpu_custom_call.1']
    #allocation7 [shape = 'u8[512]{0}', space=vmem, size = 0x400, scoped, tag = 'input window, operand 4, single buffered']
    #allocation8 [shape = 'u8[2048]{0}', space=vmem, size = 0x800, scoped, tag = 'output window, operand 0, single buffered']
    %14 = vsyncpa [#allocation3], 0
    %15 = vsyncpa [#allocation6], 0
    %16 = vsyncpa [#allocation4], 0
    // Predicated region
    $region2: #{tpu_custom_call.1} parent=1 // pred_check
      _
    $region3: #{tpu_custom_call.1} parent=1 // pred_check_branch
      %18 = sbr.rel (0) target = $region5
    $region4: #{tpu_custom_call.1} parent=1 // pred_region
      %20 = vsyncadd [#allocation3], 0
      %s22 = sshll.u32 %s0, 4
      %s23 = int_to_ptr.hbm [resolvable:$true] %s22
      %s24 = sshll.u32 [#allocation2], 4
      %s25 = int_to_ptr.vmem [resolvable:$true] %s24
      %27 = dma.hbm_to_vmem [thread:$0]  %s23, 32, %s25, [#allocation3]
    $region5: #{tpu_custom_call.1} parent=1 // pred_fallthru
      _
    // Predicated region
    $region6: #{tpu_custom_call.1} parent=1 // pred_check
      _
    $region7: #{tpu_custom_call.1} parent=1 // pred_check_branch
      %29 = sbr.rel (0) target = $region9
    $region8: #{tpu_custom_call.1} parent=1 // pred_region
      _
    $region9: #{tpu_custom_call.1} parent=1 // pred_fallthru
      _
    // Predicated region
    $region10: #{tpu_custom_call.1} parent=1 // pred_check
      _
    $region11: #{tpu_custom_call.1} parent=1 // pred_check_branch
      %31 = sbr.rel (0) target = $region13
    $region12: #{tpu_custom_call.1} parent=1 // pred_region
      %33 = vsyncadd [#allocation6], 0
      %s35 = sshll.u32 %s2, 4
      %s36 = int_to_ptr.hbm [resolvable:$true] %s35
      %s37 = sshll.u32 [#allocation5], 4
      %s38 = int_to_ptr.vmem [resolvable:$true] %s37
      %40 = dma.hbm_to_vmem [thread:$0]  %s36, 16, %s38, [#allocation6]
    $region13: #{tpu_custom_call.1} parent=1 // pred_fallthru
      _
    // Predicated region
    $region14: #{tpu_custom_call.1} parent=1 // pred_check
      _
    $region15: #{tpu_custom_call.1} parent=1 // pred_check_branch
      %42 = sbr.rel (0) target = $region17
    $region16: #{tpu_custom_call.1} parent=1 // pred_region
      _
    $region17: #{tpu_custom_call.1} parent=1 // pred_fallthru
      _
    // Predicated region
    $region18: #{tpu_custom_call.1} parent=1 // pred_check
      _
    $region19: #{tpu_custom_call.1} parent=1 // pred_check_branch
      %44 = sbr.rel (0) target = $region21
    $region20: #{tpu_custom_call.1} parent=1 // pred_region
      %46 = vsyncadd [#allocation6], 0
      %s48 = sshll.u32 %s4, 4
      %s49 = int_to_ptr.hbm [resolvable:$true] %s48
      %s50 = sshll.u32 [#allocation7], 4
      %s51 = int_to_ptr.vmem [resolvable:$true] %s50
      %53 = dma.hbm_to_vmem [thread:$0]  %s49, 16, %s51, [#allocation6]
    $region21: #{tpu_custom_call.1} parent=1 // pred_fallthru
      _
    // Predicated region
    $region22: #{tpu_custom_call.1} parent=1 // pred_check
      _
    $region23: #{tpu_custom_call.1} parent=1 // pred_check_branch
      %55 = sbr.rel (0) target = $region25
    $region24: #{tpu_custom_call.1} parent=1 // pred_region
      _
    $region25: #{tpu_custom_call.1} parent=1 // pred_fallthru
      _
    // Predicated region
    $region26: #{tpu_custom_call.1} parent=1 // pred_check
      _
    $region27: #{tpu_custom_call.1} parent=1 // pred_check_branch
      %57 = sbr.rel (0) target = $region29
    $region28: #{tpu_custom_call.1} parent=1 // pred_region
      _
    $region29: #{tpu_custom_call.1} parent=1 // pred_fallthru
      _
    // Predicated region
    $region30: #{tpu_custom_call.1} parent=1 // pred_check
      _
    $region31: #{tpu_custom_call.1} parent=1 // pred_check_branch
      %59 = sbr.rel (0) target = $region33
    $region32: #{tpu_custom_call.1} parent=1 // pred_region
      _
    $region33: #{tpu_custom_call.1} parent=1 // pred_fallthru
      _
    // Predicated region
    $region34: #{tpu_custom_call.1} parent=1 // pred_check
      _
    $region35: #{tpu_custom_call.1} parent=1 // pred_check_branch
      %61 = sbr.rel (0) target = $region37
    $region36: #{tpu_custom_call.1} parent=1 // pred_region
      _
    $region37: #{tpu_custom_call.1} parent=1 // pred_fallthru
      _
    // Predicated region
    $region38: #{tpu_custom_call.1} parent=1 // pred_check
      _
    $region39: #{tpu_custom_call.1} parent=1 // pred_check_branch
      %63 = sbr.rel (0) target = $region41
    $region40: #{tpu_custom_call.1} parent=1 // pred_region
      %65 = dma.done [#allocation3], 32
    $region41: #{tpu_custom_call.1} parent=1 // pred_fallthru
      _
    // Predicated region
    $region42: #{tpu_custom_call.1} parent=1 // pred_check
      _
    $region43: #{tpu_custom_call.1} parent=1 // pred_check_branch
      %67 = sbr.rel (0) target = $region45
    $region44: #{tpu_custom_call.1} parent=1 // pred_region
      %69 = dma.done [#allocation6], 16
    $region45: #{tpu_custom_call.1} parent=1 // pred_fallthru
      _
    // Predicated region
    $region46: #{tpu_custom_call.1} parent=1 // pred_check
      _
    $region47: #{tpu_custom_call.1} parent=1 // pred_check_branch
      %71 = sbr.rel (0) target = $region49
    $region48: #{tpu_custom_call.1} parent=1 // pred_region
      %73 = dma.done [#allocation6], 16
    $region49: #{tpu_custom_call.1} parent=1 // pred_fallthru
      _
    %v74 = vld [vmem:[#allocation2] sm:$0x3]
    %v75 = vld [vmem:[%s1] sm:$0xff]
    %v76 = vld [vmem:[%s1 + $0x8] sm:$0xff]
    %v77 = vld [vmem:[%s1 + $0x10] sm:$0xff]
    %v78 = vld [vmem:[%s1 + $0x18] sm:$0xff]
    %v79 = vld [vmem:[%s1 + $0x20] sm:$0xff]
    %v80 = vld [vmem:[%s1 + $0x28] sm:$0xff]
    %v81 = vld [vmem:[%s1 + $0x30] sm:$0xff]
    %v82 = vld [vmem:[%s1 + $0x38] sm:$0xff]
    %v83 = vld [vmem:[%s1 + $0x40] sm:$0xff]
    %v84 = vld [vmem:[%s1 + $0x48] sm:$0xff]
    %v85 = vld [vmem:[%s1 + $0x50] sm:$0xff]
    %v86 = vld [vmem:[%s1 + $0x58] sm:$0xff]
    %v87 = vld [vmem:[%s1 + $0x60] sm:$0xff]
    %v88 = vld [vmem:[%s1 + $0x68] sm:$0xff]
    %v89 = vld [vmem:[%s1 + $0x70] sm:$0xff]
    %v90 = vld [vmem:[%s1 + $0x78] sm:$0xff]
    %v91 = vld [vmem:[#allocation5] sm:$0x1]
    %v93 = vperm.slane %v91, 0
    %95 = vmatpush.msra.mxu0 %v90
    %96 = vmatpush.msra.mxu0 %v89
    %97 = vmatpush.msra.mxu0 %v88
    %98 = vmatpush.msra.mxu0 %v87
    %99 = vmatpush.msra.mxu0 %v86
    %100 = vmatpush.msra.mxu0 %v85
    %101 = vmatpush.msra.mxu0 %v84
    %102 = vmatpush.msra.mxu0 %v83
    %103 = vmatpush.msra.mxu0 %v82
    %104 = vmatpush.msra.mxu0 %v81
    %105 = vmatpush.msra.mxu0 %v80
    %106 = vmatpush.msra.mxu0 %v79
    %107 = vmatpush.msra.mxu0 %v78
    %108 = vmatpush.msra.mxu0 %v77
    %109 = vmatpush.msra.mxu0 %v76
    %110 = vmatpush.msra.mxu0 %v75
    %111 = vmatmul.f32.gmra.mxu0 %v74
    %v112 = vpop.f32.mrf.mxu0
    %v113 = vadd.f32 %v93, %v112
    %114 = vdwg.mxu0
    %v115 = vxor.u32 %v113, 2147483648
    %v116 = vmul.f32 %v115, 1.442695
    %v117 = vpow.pop %v116
    %v118 = vadd.f32 %v117, 1.0
    %v119 = vrcp.pop %v118
    %v120 = vmul.f32 %v118, %v119
    %v121 = vsub.f32 1.0, %v120
    %v122 = vmul.f32 %v119, %v121
    %v123 = vadd.f32 %v119, %v122
    %vm124 = vweird.f32 %v118
    %vm125 = vweird.f32 %v119
    %vm126 = vmor %vm124, %vm125
    %v127 = vsel %vm126, %v119, %v123
    %v128 = vand.u32 2147483647, %v118
    %vm129 = vcmp.eq.f32.partialorder %v128, 8.507059e+37
    %v130 = vand.u32 %v118, 2147483648
    %v131 = vor.u32 1.1754944e-38, %v130
    %v132 = vsel %vm129, %v131, %v127
    %v133 = vmul.f32 1.0, %v132
    %v134 = vmul.f32 %v113, %v133
    %v135 = vld [vmem:[%s3] sm:$0xff]
    %v136 = vld [vmem:[%s3 + $0x8] sm:$0xff]
    %v137 = vld [vmem:[%s3 + $0x10] sm:$0xff]
    %v138 = vld [vmem:[%s3 + $0x18] sm:$0xff]
    %v139 = vld [vmem:[%s3 + $0x20] sm:$0xff]
    %v140 = vld [vmem:[%s3 + $0x28] sm:$0xff]
    %v141 = vld [vmem:[%s3 + $0x30] sm:$0xff]
    %v142 = vld [vmem:[%s3 + $0x38] sm:$0xff]
    %v143 = vld [vmem:[%s3 + $0x40] sm:$0xff]
    %v144 = vld [vmem:[%s3 + $0x48] sm:$0xff]
    %v145 = vld [vmem:[%s3 + $0x50] sm:$0xff]
    %v146 = vld [vmem:[%s3 + $0x58] sm:$0xff]
    %v147 = vld [vmem:[%s3 + $0x60] sm:$0xff]
    %v148 = vld [vmem:[%s3 + $0x68] sm:$0xff]
    %v149 = vld [vmem:[%s3 + $0x70] sm:$0xff]
    %v150 = vld [vmem:[%s3 + $0x78] sm:$0xff]
    %v151 = vld [vmem:[#allocation7] sm:$0x1]
    %v153 = vperm.slane %v151, 0
    %155 = vmatpush.msra.mxu0 %v150
    %156 = vmatpush.msra.mxu0 %v149
    %157 = vmatpush.msra.mxu0 %v148
    %158 = vmatpush.msra.mxu0 %v147
    %159 = vmatpush.msra.mxu0 %v146
    %160 = vmatpush.msra.mxu0 %v145
    %161 = vmatpush.msra.mxu0 %v144
    %162 = vmatpush.msra.mxu0 %v143
    %163 = vmatpush.msra.mxu0 %v142
    %164 = vmatpush.msra.mxu0 %v141
    %165 = vmatpush.msra.mxu0 %v140
    %166 = vmatpush.msra.mxu0 %v139
    %167 = vmatpush.msra.mxu0 %v138
    %168 = vmatpush.msra.mxu0 %v137
    %169 = vmatpush.msra.mxu0 %v136
    %170 = vmatpush.msra.mxu0 %v135
    %171 = vmatmul.f32.gmra.mxu0 %v134
    %v172 = vpop.f32.mrf.mxu0
    %v173 = vadd.f32 %v153, %v172
    %174 = vdwg.mxu0
    %v175 = vxor.u32 %v173, 2147483648
    %v176 = vmul.f32 %v175, 1.442695
    %v177 = vpow.pop %v176
    %v178 = vadd.f32 %v177, 1.0
    %v179 = vrcp.pop %v178
    %v180 = vmul.f32 %v178, %v179
    %v181 = vsub.f32 1.0, %v180
    %v182 = vmul.f32 %v179, %v181
    %v183 = vadd.f32 %v179, %v182
    %vm184 = vweird.f32 %v178
    %vm185 = vweird.f32 %v179
    %vm186 = vmor %vm184, %vm185
    %v187 = vsel %vm186, %v179, %v183
    %v188 = vand.u32 2147483647, %v178
    %vm189 = vcmp.eq.f32.partialorder %v188, 8.507059e+37
    %v190 = vand.u32 %v178, 2147483648
    %v191 = vor.u32 1.1754944e-38, %v190
    %v192 = vsel %vm189, %v191, %v187
    %v193 = vmul.f32 1.0, %v192
    %v194 = vmul.f32 %v173, %v193
    %v195 = vld [vmem:[%s5] sm:$0xff]
    %v196 = vld [vmem:[%s5 + $0x8] sm:$0xff]
    %v197 = vld [vmem:[%s5 + $0x10] sm:$0xff]
    %v198 = vld [vmem:[%s5 + $0x18] sm:$0xff]
    %v199 = vld [vmem:[%s5 + $0x20] sm:$0xff]
    %v200 = vld [vmem:[%s5 + $0x28] sm:$0xff]
    %v201 = vld [vmem:[%s5 + $0x30] sm:$0xff]
    %v202 = vld [vmem:[%s5 + $0x38] sm:$0xff]
    %v203 = vld [vmem:[%s5 + $0x40] sm:$0xff]
    %v204 = vld [vmem:[%s5 + $0x48] sm:$0xff]
    %v205 = vld [vmem:[%s5 + $0x50] sm:$0xff]
    %v206 = vld [vmem:[%s5 + $0x58] sm:$0xff]
    %v207 = vld [vmem:[%s5 + $0x60] sm:$0xff]
    %v208 = vld [vmem:[%s5 + $0x68] sm:$0xff]
    %v209 = vld [vmem:[%s5 + $0x70] sm:$0xff]
    %v210 = vld [vmem:[%s5 + $0x78] sm:$0xff]
    %v211 = vld [vmem:[%s6] sm:$0x1]
    %v213 = vperm.slane %v211, 0
    %215 = vmatpush.msra.mxu0 %v210
    %216 = vmatpush.msra.mxu0 %v209
    %217 = vmatpush.msra.mxu0 %v208
    %218 = vmatpush.msra.mxu0 %v207
    %219 = vmatpush.msra.mxu0 %v206
    %220 = vmatpush.msra.mxu0 %v205
    %221 = vmatpush.msra.mxu0 %v204
    %222 = vmatpush.msra.mxu0 %v203
    %223 = vmatpush.msra.mxu0 %v202
    %224 = vmatpush.msra.mxu0 %v201
    %225 = vmatpush.msra.mxu0 %v200
    %226 = vmatpush.msra.mxu0 %v199
    %227 = vmatpush.msra.mxu0 %v198
    %228 = vmatpush.msra.mxu0 %v197
    %229 = vmatpush.msra.mxu0 %v196
    %230 = vmatpush.msra.mxu0 %v195
    %231 = vmatmul.f32.gmra.mxu0 %v194
    %v232 = vpop.f32.mrf.mxu0
    %v233 = vadd.f32 %v213, %v232
    %234 = vdwg.mxu0
    %v235 = vld [vmem:[%s7] sm:$0xff]
    %v236 = vld [vmem:[%s7 + $0x8] sm:$0xff]
    %v237 = vld [vmem:[%s7 + $0x10] sm:$0xff]
    %v238 = vld [vmem:[%s7 + $0x18] sm:$0xff]
    %v239 = vld [vmem:[%s7 + $0x20] sm:$0xff]
    %v240 = vld [vmem:[%s7 + $0x28] sm:$0xff]
    %v241 = vld [vmem:[%s7 + $0x30] sm:$0xff]
    %v242 = vld [vmem:[%s7 + $0x38] sm:$0xff]
    %v243 = vld [vmem:[%s8] sm:$0x1]
    %v245 = vperm.slane %v243, 0
    %vm247 = vcmask 523264
    %v249 = vsel %vm247, %v233, 0
    %251 = vmatpush.msra.mxu0 0.0
    %252 = vmatpush.msra.mxu0 0.0
    %253 = vmatpush.msra.mxu0 0.0
    %254 = vmatpush.msra.mxu0 0.0
    %255 = vmatpush.msra.mxu0 0.0
    %256 = vmatpush.msra.mxu0 0.0
    %257 = vmatpush.msra.mxu0 0.0
    %258 = vmatpush.msra.mxu0 0.0
    %259 = vmatpush.msra.mxu0 %v242
    %260 = vmatpush.msra.mxu0 %v241
    %261 = vmatpush.msra.mxu0 %v240
    %262 = vmatpush.msra.mxu0 %v239
    %263 = vmatpush.msra.mxu0 %v238
    %264 = vmatpush.msra.mxu0 %v237
    %265 = vmatpush.msra.mxu0 %v236
    %266 = vmatpush.msra.mxu0 %v235
    %267 = vmatmul.f32.gmra.mxu0 %v249
    %v268 = vpop.f32.mrf.mxu0
    %v269 = vadd.f32 %v245, %v268
    %270 = vdwg.mxu0
    %271 = vst [vmem:[#allocation8] sm:$0x3] %v269
    %s272 = scalar_lea.vmem %s5, 128
    %v273 = vld [vmem:[%s272] sm:$0xff]
    %v274 = vld [vmem:[%s272 + $0x8] sm:$0xff]
    %v275 = vld [vmem:[%s272 + $0x10] sm:$0xff]
    %v276 = vld [vmem:[%s272 + $0x18] sm:$0xff]
    %v277 = vld [vmem:[%s272 + $0x20] sm:$0xff]
    %v278 = vld [vmem:[%s272 + $0x28] sm:$0xff]
    %v279 = vld [vmem:[%s272 + $0x30] sm:$0xff]
    %v280 = vld [vmem:[%s272 + $0x38] sm:$0xff]
    %v281 = vld [vmem:[%s272 + $0x40] sm:$0xff]
    %v282 = vld [vmem:[%s272 + $0x48] sm:$0xff]
    %v283 = vld [vmem:[%s272 + $0x50] sm:$0xff]
    %v284 = vld [vmem:[%s272 + $0x58] sm:$0xff]
    %v285 = vld [vmem:[%s272 + $0x60] sm:$0xff]
    %v286 = vld [vmem:[%s272 + $0x68] sm:$0xff]
    %v287 = vld [vmem:[%s272 + $0x70] sm:$0xff]
    %v288 = vld [vmem:[%s272 + $0x78] sm:$0xff]
    %s289 = scalar_lea.vmem %s6, 1
    %v290 = vld [vmem:[%s289] sm:$0x1]
    %v292 = vperm.slane %v290, 0
    %294 = vmatpush.msra.mxu0 %v288
    %295 = vmatpush.msra.mxu0 %v287
    %296 = vmatpush.msra.mxu0 %v286
    %297 = vmatpush.msra.mxu0 %v285
    %298 = vmatpush.msra.mxu0 %v284
    %299 = vmatpush.msra.mxu0 %v283
    %300 = vmatpush.msra.mxu0 %v282
    %301 = vmatpush.msra.mxu0 %v281
    %302 = vmatpush.msra.mxu0 %v280
    %303 = vmatpush.msra.mxu0 %v279
    %304 = vmatpush.msra.mxu0 %v278
    %305 = vmatpush.msra.mxu0 %v277
    %306 = vmatpush.msra.mxu0 %v276
    %307 = vmatpush.msra.mxu0 %v275
    %308 = vmatpush.msra.mxu0 %v274
    %309 = vmatpush.msra.mxu0 %v273
    %310 = vmatmul.f32.gmra.mxu0 %v194
    %v311 = vpop.f32.mrf.mxu0
    %v312 = vadd.f32 %v292, %v311
    %313 = vdwg.mxu0
    %s314 = scalar_lea.vmem %s7, 64
    %v315 = vld [vmem:[%s314] sm:$0xff]
    %v316 = vld [vmem:[%s314 + $0x8] sm:$0xff]
    %v317 = vld [vmem:[%s314 + $0x10] sm:$0xff]
    %v318 = vld [vmem:[%s314 + $0x18] sm:$0xff]
    %v319 = vld [vmem:[%s314 + $0x20] sm:$0xff]
    %v320 = vld [vmem:[%s314 + $0x28] sm:$0xff]
    %v321 = vld [vmem:[%s314 + $0x30] sm:$0xff]
    %v322 = vld [vmem:[%s314 + $0x38] sm:$0xff]
    %s323 = scalar_lea.vmem %s8, 1
    %v324 = vld [vmem:[%s323] sm:$0x1]
    %v326 = vperm.slane %v324, 0
    %v329 = vsel %vm247, %v312, 0
    %331 = vmatpush.msra.mxu0 0.0
    %332 = vmatpush.msra.mxu0 0.0
    %333 = vmatpush.msra.mxu0 0.0
    %334 = vmatpush.msra.mxu0 0.0
    %335 = vmatpush.msra.mxu0 0.0
    %336 = vmatpush.msra.mxu0 0.0
    %337 = vmatpush.msra.mxu0 0.0
    %338 = vmatpush.msra.mxu0 0.0
    %339 = vmatpush.msra.mxu0 %v322
    %340 = vmatpush.msra.mxu0 %v321
    %341 = vmatpush.msra.mxu0 %v320
    %342 = vmatpush.msra.mxu0 %v319
    %343 = vmatpush.msra.mxu0 %v318
    %344 = vmatpush.msra.mxu0 %v317
    %345 = vmatpush.msra.mxu0 %v316
    %346 = vmatpush.msra.mxu0 %v315
    %347 = vmatmul.f32.gmra.mxu0 %v329
    %v348 = vpop.f32.mrf.mxu0
    %v349 = vadd.f32 %v326, %v348
    %350 = vdwg.mxu0
    %s351 = scalar_lea.vmem [#allocation8], 2
    %352 = vst [vmem:[%s351] sm:$0x3] %v349
    // Predicated region
    $region50: #{tpu_custom_call.1} parent=1 // pred_check
      _
    $region51: #{tpu_custom_call.1} parent=1 // pred_check_branch
      %354 = sbr.rel (0) target = $region53
    $region52: #{tpu_custom_call.1} parent=1 // pred_region
      %356 = vsyncadd [#allocation4], 0
      %s357 = sshll.u32 [#allocation8], 4
      %s358 = int_to_ptr.vmem [resolvable:$true] %s357
      %s359 = sshll.u32 %s9, 4
      %s360 = int_to_ptr.hbm [resolvable:$true] %s359
      %365 = dma.vmem_to_hbm [thread:$0]  %s358, 64, %s360, [#allocation4], 32, 32, 2
    $region53: #{tpu_custom_call.1} parent=1 // pred_fallthru
      _
    // Predicated region
    $region54: #{tpu_custom_call.1} parent=1 // pred_check
      _
    $region55: #{tpu_custom_call.1} parent=1 // pred_check_branch
      %367 = sbr.rel (0) target = $region57
    $region56: #{tpu_custom_call.1} parent=1 // pred_region
      %369 = dma.done [#allocation4], 64
    $region57: #{tpu_custom_call.1} parent=1 // pred_fallthru
      _
    %370 = vsyncpa [#allocation3], 1
    %371 = vsyncpa [#allocation6], 1
    %372 = vsyncpa [#allocation4], 1

</llo_original>
